<compile_context>
chip_gen: v6e
topology: v6e:2x2x1
jax: 0.10.0
libtpu: 0.0.40
codegen_flags: <defaults>
</compile_context>

<pallas_src>
import jax
import jax.numpy as jnp
import numpy as np
from jax.experimental import pallas as pl
from jax.experimental.pallas import tpu as pltpu


# -----------------------------------------------------------------------------
# Kernel: both conv3x3 + BN(eval) + ReLU stages fused; one image per grid step.
# -----------------------------------------------------------------------------
def _fused_backbone_kernel(x_ref, w1_ref, sc1_ref, sh1_ref,
                           w2_ref, sc2_ref, sh2_ref, o_ref):
    # x_ref  : (H, W*Cin)  f32   lane-dense input slab for one image
    # w*_ref : (3*W*Ci, W*Co) bf16  K-stacked banded conv weights
    # sc*/sh*: (1, W*Co)   f32   folded BN scale / shift (tiled across w)
    # o_ref  : (H, W*C2)   f32   lane-dense output slab for one image
    H = x_ref.shape[0]
    h = jax.lax.broadcasted_iota(jnp.int32, (H, 1), 0)   # row index within image

    def stack_vertical(a):
        # [a(r-1) | a(r) | a(r+1)]: XLU sublane rolls + boundary mask
        # (mask also kills the roll wrap-around rows = vertical zero padding).
        up = jnp.where(h > 0,     pltpu.roll(a, 1,     axis=0), 0.0)   # a[r-1]
        dn = jnp.where(h < H - 1, pltpu.roll(a, H - 1, axis=0), 0.0)   # a[r+1]
        return jnp.concatenate([up, a, dn], axis=1)

    def stage(a, w_ref, sc_ref, sh_ref):
        a3 = stack_vertical(a).astype(jnp.bfloat16)       # bf16 MXU operands
        u = jnp.dot(a3, w_ref[...], preferred_element_type=jnp.float32)
        return jnp.maximum(u * sc_ref[...] + sh_ref[...], 0.0)   # f32 epilogue

    y1 = stage(x_ref[...].astype(jnp.float32), w1_ref, sc1_ref, sh1_ref)
    o_ref[...] = stage(y1, w2_ref, sc2_ref, sh2_ref).astype(o_ref.dtype)


# -----------------------------------------------------------------------------
# One-time (host-side, numpy) parameter packing.
# -----------------------------------------------------------------------------
def _fold_bn_np(conv_b, gamma, beta, mean, var, eps=1e-5):
    scale = gamma / np.sqrt(var + eps)
    shift = beta - mean * scale + conv_b * scale
    return scale.astype(np.float32), shift.astype(np.float32)


def _band_weights_np(w_oihw, W):
    """torch conv weight (Co,Ci,3,3) -> (3*W*Ci, W*Co) K-stacked banded matrix.

    Row block dy holds Wband_dy with
      Wband_dy[w'*Ci+ci, w*Co+co] = w[co, ci, dy, dx],  w' = w + dx - 1,
    i.e. horizontal taps + zero width-padding folded in; vertical taps are
    handled by the rolled/masked activation K-stack inside the kernel.
    """
    Co, Ci, KH, KW = w_oihw.shape
    blocks = []
    for dy in range(KH):
        wd = np.zeros((W * Ci, W * Co), np.float32)
        for dx in range(KW):
            tap = np.asarray(w_oihw[:, :, dy, dx]).T              # (Ci, Co)
            shift_mat = np.eye(W, W, k=1 - dx, dtype=np.float32)  # w' -> w
            wd += np.kron(shift_mat, tap)
        blocks.append(wd)
    return np.concatenate(blocks, axis=0)


# -----------------------------------------------------------------------------
# Builder: pack params once, return jitted forward (NCHW -> NCHW).
# -----------------------------------------------------------------------------
def make_backbone_cam(params, *, N, Cin, H, W, eps=1e-5):
    p = {k: np.asarray(v, np.float32) for k, v in params.items()}
    C1 = p["w1"].shape[0]
    C2 = p["w2"].shape[0]
    assert H % 8 == 0, "per-image row block must be sublane aligned (H % 8 == 0)"

    # TODO(synk): at realistic W the dense banded weights are O(W^2*Ci*Co); tile
    # the output-width axis in the grid and index_map only the 3-block K band so
    # weight VMEM and FLOPs become O(W) (mandatory before scaling on v7x 64MiB).
    w1s = jnp.asarray(_band_weights_np(p["w1"], W), jnp.bfloat16)   # (3*W*Cin, W*C1)
    w2s = jnp.asarray(_band_weights_np(p["w2"], W), jnp.bfloat16)   # (3*W*C1,  W*C2)
    sc1, sh1 = _fold_bn_np(p["b1"], p["g1"], p["be1"], p["m1"], p["v1"], eps)
    sc2, sh2 = _fold_bn_np(p["b2"], p["g2"], p["be2"], p["m2"], p["v2"], eps)
    sc1s = jnp.asarray(np.tile(sc1, W).reshape(1, W * C1))
    sh1s = jnp.asarray(np.tile(sh1, W).reshape(1, W * C1))
    sc2s = jnp.asarray(np.tile(sc2, W).reshape(1, W * C2))
    sh2s = jnp.asarray(np.tile(sh2, W).reshape(1, W * C2))

    flops = N * 2 * H * ((3 * W * Cin) * (W * C1) + (3 * W * C1) * (W * C2))
    bytes_accessed = int(N * H * W * Cin * 4 + w1s.size * 2 + w2s.size * 2
                         + 4 * (2 * W * C1 + 2 * W * C2) + N * H * W * C2 * 4)

    call = pl.pallas_call(
        _fused_backbone_kernel,
        out_shape=jax.ShapeDtypeStruct((N * H, W * C2), jnp.float32),
        grid_spec=pltpu.PrefetchScalarGridSpec(
            num_scalar_prefetch=0,
            grid=(N,),                                    # one image per step
            in_specs=[
                pl.BlockSpec((H, W * Cin), lambda n: (n, 0)),
                pl.BlockSpec((3 * W * Cin, W * C1), lambda n: (0, 0)),
                pl.BlockSpec((1, W * C1), lambda n: (0, 0)),
                pl.BlockSpec((1, W * C1), lambda n: (0, 0)),
                pl.BlockSpec((3 * W * C1, W * C2), lambda n: (0, 0)),
                pl.BlockSpec((1, W * C2), lambda n: (0, 0)),
                pl.BlockSpec((1, W * C2), lambda n: (0, 0)),
            ],
            out_specs=pl.BlockSpec((H, W * C2), lambda n: (n, 0)),
        ),
        compiler_params=pltpu.CompilerParams(
            dimension_semantics=("parallel",),            # megacore / 2nd TC on v7x
            vmem_limit_bytes=32 * 1024 * 1024,
        ),
        cost_estimate=pl.CostEstimate(
            flops=flops, transcendentals=0, bytes_accessed=bytes_accessed),
    )

    @jax.jit
    def forward(x_nchw):
        # NCHW -> NHWC -> lane-dense slab (N*H, W*Cin); layout only, no compute.
        x_slab = jnp.transpose(x_nchw, (0, 2, 3, 1)).reshape(N * H, W * Cin)
        out = call(x_slab, w1s, sc1s, sh1s, w2s, sc2s, sh2s)
        y = out.reshape(N, H, W, C2)
        return jnp.transpose(y, (0, 3, 1, 2))             # NHWC -> NCHW

    return forward


# -----------------------------------------------------------------------------
# Pure-JAX reference (lax conv) for correctness checking.
# -----------------------------------------------------------------------------
def _ref_stage(x_nhwc, w_oihw, conv_b, gamma, beta, mean, var, eps=1e-5):
    w_hwio = jnp.transpose(w_oihw, (2, 3, 1, 0))
    y = jax.lax.conv_general_dilated(
        x_nhwc, w_hwio, window_strides=(1, 1), padding="SAME",
        dimension_numbers=("NHWC", "HWIO", "NHWC"))
    y = y + conv_b
    scale = gamma / jnp.sqrt(var + eps)
    y = (y - mean) * scale + beta
    return jnp.maximum(y, 0.0)


def reference_forward(x_nchw, p):
    x = jnp.transpose(x_nchw, (0, 2, 3, 1))
    x = _ref_stage(x, p["w1"], p["b1"], p["g1"], p["be1"], p["m1"], p["v1"])
    x = _ref_stage(x, p["w2"], p["b2"], p["g2"], p["be2"], p["m2"], p["v2"])
    return jnp.transpose(x, (0, 3, 1, 2))


def make_params(key, cin=4, c1=8, c2=16):
    ks = jax.random.split(key, 12)
    def conv_w(k, co, ci):
        return 0.2 * jax.random.normal(k, (co, ci, 3, 3), jnp.float32)
    return {
        # stage 1
        "w1": conv_w(ks[0], c1, cin),
        "b1": 0.1 * jax.random.normal(ks[1], (c1,), jnp.float32),
        "g1": 1.0 + 0.1 * jax.random.normal(ks[2], (c1,), jnp.float32),
        "be1": 0.1 * jax.random.normal(ks[3], (c1,), jnp.float32),
        "m1": 0.05 * jax.random.normal(ks[4], (c1,), jnp.float32),
        "v1": 1.0 + 0.1 * jax.random.uniform(ks[5], (c1,), jnp.float32),
        # stage 2
        "w2": conv_w(ks[6], c2, c1),
        "b2": 0.1 * jax.random.normal(ks[7], (c2,), jnp.float32),
        "g2": 1.0 + 0.1 * jax.random.normal(ks[8], (c2,), jnp.float32),
        "be2": 0.1 * jax.random.normal(ks[9], (c2,), jnp.float32),
        "m2": 0.05 * jax.random.normal(ks[10], (c2,), jnp.float32),
        "v2": 1.0 + 0.1 * jax.random.uniform(ks[11], (c2,), jnp.float32),
    }


if __name__ == "__main__":
    key = jax.random.PRNGKey(0)
    kx, kp = jax.random.split(key)
    N, Cin, H, W = 2, 4, 16, 16
    x = jax.random.normal(kx, (N, Cin, H, W), jnp.float32)   # NCHW, like torch
    params = make_params(kp)

    forward = make_backbone_cam(params, N=N, Cin=Cin, H=H, W=W)
    y = forward(x)
    jax.block_until_ready(y)

    y_ref = reference_forward(x, params)
    assert y.shape == (N, 16, H, W)
    max_err = float(np.max(np.abs(np.asarray(y) - np.asarray(y_ref))))
    # bf16 MXU operands (f32 accumulation) -> loosened tolerance per review.
    assert np.allclose(np.asarray(y), np.asarray(y_ref),
                       atol=5e-2, rtol=5e-2), max_err
    print("KERNEL_OK")
</pallas_src>

<mosaic_0001>
module attributes {stable_mosaic.version = 11 : i64} {
  func.func @_fused_backbone_kernel(%arg0: i32, %arg1: memref<16x64xf32, #tpu.memory_space<vmem>>, %arg2: memref<192x128xbf16, #tpu.memory_space<vmem>>, %arg3: memref<1x128xf32, #tpu.memory_space<vmem>>, %arg4: memref<1x128xf32, #tpu.memory_space<vmem>>, %arg5: memref<384x256xbf16, #tpu.memory_space<vmem>>, %arg6: memref<1x256xf32, #tpu.memory_space<vmem>>, %arg7: memref<1x256xf32, #tpu.memory_space<vmem>>, %arg8: memref<16x256xf32, #tpu.memory_space<vmem>>) attributes {dimension_semantics = [#tpu.dimension_semantics<parallel>], iteration_bounds = array<i64: 2>, scalar_prefetch = 0 : i64, scratch_operands = 0 : i64, tpu.core_type = #tpu.core_type<tc>, window_params = [{transform_indices = @transform_0, window_bounds = array<i64: 16, 64>}, {pipeline_mode = #tpu.pipeline_mode<synchronous>, transform_indices = @transform_1, window_bounds = array<i64: 192, 128>}, {pipeline_mode = #tpu.pipeline_mode<synchronous>, transform_indices = @transform_2, window_bounds = array<i64: 1, 128>}, {pipeline_mode = #tpu.pipeline_mode<synchronous>, transform_indices = @transform_3, window_bounds = array<i64: 1, 128>}, {pipeline_mode = #tpu.pipeline_mode<synchronous>, transform_indices = @transform_4, window_bounds = array<i64: 384, 256>}, {pipeline_mode = #tpu.pipeline_mode<synchronous>, transform_indices = @transform_5, window_bounds = array<i64: 1, 256>}, {pipeline_mode = #tpu.pipeline_mode<synchronous>, transform_indices = @transform_6, window_bounds = array<i64: 1, 256>}, {transform_indices = @transform_7, window_bounds = array<i64: 16, 256>}]} {
    %0 = tpu.iota {dimensions = array<i32: 0>} : vector<16x1xi32>
    %c0 = arith.constant 0 : index
    %c0_0 = arith.constant 0 : index
    %1 = vector.load %arg1[%c0, %c0_0] : memref<16x64xf32, #tpu.memory_space<vmem>>, vector<16x64xf32>
    %c0_i32 = arith.constant 0 : i32
    %2 = vector.broadcast %c0_i32 : i32 to vector<16x1xi32>
    %3 = arith.cmpi sgt, %0, %2 : vector<16x1xi32>
    %c1_i32 = arith.constant 1 : i32
    %4 = tpu.dynamic_rotate %1 by %c1_i32 dim 0 : vector<16x64xf32>, i32 -> vector<16x64xf32>
    %cst = arith.constant 0.000000e+00 : f32
    %5 = vector.shape_cast %3 : vector<16x1xi1> to vector<16x1xi1>
    %6 = vector.broadcast %5 : vector<16x1xi1> to vector<16x64xi1>
    %7 = vector.broadcast %cst : f32 to vector<16x64xf32>
    %8 = arith.select %6, %4, %7 : vector<16x64xi1>, vector<16x64xf32>
    %c15_i32 = arith.constant 15 : i32
    %9 = vector.broadcast %c15_i32 : i32 to vector<16x1xi32>
    %10 = arith.cmpi slt, %0, %9 : vector<16x1xi32>
    %c15_i32_1 = arith.constant 15 : i32
    %11 = tpu.dynamic_rotate %1 by %c15_i32_1 dim 0 : vector<16x64xf32>, i32 -> vector<16x64xf32>
    %cst_2 = arith.constant 0.000000e+00 : f32
    %12 = vector.shape_cast %10 : vector<16x1xi1> to vector<16x1xi1>
    %13 = vector.broadcast %12 : vector<16x1xi1> to vector<16x64xi1>
    %14 = vector.broadcast %cst_2 : f32 to vector<16x64xf32>
    %15 = arith.select %13, %11, %14 : vector<16x64xi1>, vector<16x64xf32>
    %16 = tpu.concatenate %8, %1, %15 in 1 : vector<16x64xf32>, vector<16x64xf32>, vector<16x64xf32> -> vector<16x192xf32>
    %17 = arith.truncf %16 : vector<16x192xf32> to vector<16x192xbf16>
    %c0_3 = arith.constant 0 : index
    %c0_4 = arith.constant 0 : index
    %18 = vector.load %arg2[%c0_3, %c0_4] : memref<192x128xbf16, #tpu.memory_space<vmem>>, vector<192x128xbf16>
    %cst_5 = arith.constant dense<0.000000e+00> : vector<16x128xf32>
    %19 = tpu.matmul %17, %18, %cst_5 {dimension_numbers = #tpu.dot_dimension_numbers<[1], [0], [0], [1], [0, 0, 1, 1], [], []>} : vector<16x192xbf16>, vector<192x128xbf16>, vector<16x128xf32> -> vector<16x128xf32>
    %c0_6 = arith.constant 0 : index
    %c0_7 = arith.constant 0 : index
    %20 = vector.load %arg3[%c0_6, %c0_7] : memref<1x128xf32, #tpu.memory_space<vmem>>, vector<1x128xf32>
    %21 = vector.broadcast %20 : vector<1x128xf32> to vector<16x128xf32>
    %22 = arith.mulf %19, %21 : vector<16x128xf32>
    %c0_8 = arith.constant 0 : index
    %c0_9 = arith.constant 0 : index
    %23 = vector.load %arg4[%c0_8, %c0_9] : memref<1x128xf32, #tpu.memory_space<vmem>>, vector<1x128xf32>
    %24 = vector.broadcast %23 : vector<1x128xf32> to vector<16x128xf32>
    %25 = arith.addf %22, %24 : vector<16x128xf32>
    %cst_10 = arith.constant 0.000000e+00 : f32
    %26 = vector.broadcast %cst_10 : f32 to vector<16x128xf32>
    %27 = arith.maximumf %25, %26 : vector<16x128xf32>
    %c0_i32_11 = arith.constant 0 : i32
    %28 = vector.broadcast %c0_i32_11 : i32 to vector<16x1xi32>
    %29 = arith.cmpi sgt, %0, %28 : vector<16x1xi32>
    %c1_i32_12 = arith.constant 1 : i32
    %30 = tpu.dynamic_rotate %27 by %c1_i32_12 dim 0 : vector<16x128xf32>, i32 -> vector<16x128xf32>
    %cst_13 = arith.constant 0.000000e+00 : f32
    %31 = vector.shape_cast %29 : vector<16x1xi1> to vector<16x1xi1>
    %32 = vector.broadcast %31 : vector<16x1xi1> to vector<16x128xi1>
    %33 = vector.broadcast %cst_13 : f32 to vector<16x128xf32>
    %34 = arith.select %32, %30, %33 : vector<16x128xi1>, vector<16x128xf32>
    %c15_i32_14 = arith.constant 15 : i32
    %35 = vector.broadcast %c15_i32_14 : i32 to vector<16x1xi32>
    %36 = arith.cmpi slt, %0, %35 : vector<16x1xi32>
    %c15_i32_15 = arith.constant 15 : i32
    %37 = tpu.dynamic_rotate %27 by %c15_i32_15 dim 0 : vector<16x128xf32>, i32 -> vector<16x128xf32>
    %cst_16 = arith.constant 0.000000e+00 : f32
    %38 = vector.shape_cast %36 : vector<16x1xi1> to vector<16x1xi1>
    %39 = vector.broadcast %38 : vector<16x1xi1> to vector<16x128xi1>
    %40 = vector.broadcast %cst_16 : f32 to vector<16x128xf32>
    %41 = arith.select %39, %37, %40 : vector<16x128xi1>, vector<16x128xf32>
    %42 = tpu.concatenate %34, %27, %41 in 1 : vector<16x128xf32>, vector<16x128xf32>, vector<16x128xf32> -> vector<16x384xf32>
    %43 = arith.truncf %42 : vector<16x384xf32> to vector<16x384xbf16>
    %c0_17 = arith.constant 0 : index
    %c0_18 = arith.constant 0 : index
    %44 = vector.load %arg5[%c0_17, %c0_18] : memref<384x256xbf16, #tpu.memory_space<vmem>>, vector<384x256xbf16>
    %cst_19 = arith.constant dense<0.000000e+00> : vector<16x256xf32>
    %45 = tpu.matmul %43, %44, %cst_19 {dimension_numbers = #tpu.dot_dimension_numbers<[1], [0], [0], [1], [0, 0, 1, 1], [], []>} : vector<16x384xbf16>, vector<384x256xbf16>, vector<16x256xf32> -> vector<16x256xf32>
    %c0_20 = arith.constant 0 : index
    %c0_21 = arith.constant 0 : index
    %46 = vector.load %arg6[%c0_20, %c0_21] : memref<1x256xf32, #tpu.memory_space<vmem>>, vector<1x256xf32>
    %47 = vector.broadcast %46 : vector<1x256xf32> to vector<16x256xf32>
    %48 = arith.mulf %45, %47 : vector<16x256xf32>
    %c0_22 = arith.constant 0 : index
    %c0_23 = arith.constant 0 : index
    %49 = vector.load %arg7[%c0_22, %c0_23] : memref<1x256xf32, #tpu.memory_space<vmem>>, vector<1x256xf32>
    %50 = vector.broadcast %49 : vector<1x256xf32> to vector<16x256xf32>
    %51 = arith.addf %48, %50 : vector<16x256xf32>
    %cst_24 = arith.constant 0.000000e+00 : f32
    %52 = vector.broadcast %cst_24 : f32 to vector<16x256xf32>
    %53 = arith.maximumf %51, %52 : vector<16x256xf32>
    %c0_25 = arith.constant 0 : index
    %c0_26 = arith.constant 0 : index
    %54 = vector.load %arg8[%c0_25, %c0_26] : memref<16x256xf32, #tpu.memory_space<vmem>>, vector<16x256xf32>
    tpu.vector_store %arg8[%c0_25, %c0_26], %53 {strides = array<i32>} : memref<16x256xf32, #tpu.memory_space<vmem>>, vector<16x256xf32>,
    return
  }
  func.func @transform_0(%arg0: i32) -> (i32, i32) {
    %c0_i32 = arith.constant 0 : i32
    %c0_i32_0 = arith.constant 0 : i32
    return %arg0, %c0_i32 : i32, i32
  }
  func.func @transform_1(%arg0: i32) -> (i32, i32) {
    %c0_i32 = arith.constant 0 : i32
    %c0_i32_0 = arith.constant 0 : i32
    %c0_i32_1 = arith.constant 0 : i32
    return %c0_i32, %c0_i32_0 : i32, i32
  }
  func.func @transform_2(%arg0: i32) -> (i32, i32) {
    %c0_i32 = arith.constant 0 : i32
    %c0_i32_0 = arith.constant 0 : i32
    %c0_i32_1 = arith.constant 0 : i32
    return %c0_i32, %c0_i32_0 : i32, i32
  }
  func.func @transform_3(%arg0: i32) -> (i32, i32) {
    %c0_i32 = arith.constant 0 : i32
    %c0_i32_0 = arith.constant 0 : i32
    %c0_i32_1 = arith.constant 0 : i32
    return %c0_i32, %c0_i32_0 : i32, i32
  }
  func.func @transform_4(%arg0: i32) -> (i32, i32) {
    %c0_i32 = arith.constant 0 : i32
    %c0_i32_0 = arith.constant 0 : i32
    %c0_i32_1 = arith.constant 0 : i32
    return %c0_i32, %c0_i32_0 : i32, i32
  }
  func.func @transform_5(%arg0: i32) -> (i32, i32) {
    %c0_i32 = arith.constant 0 : i32
    %c0_i32_0 = arith.constant 0 : i32
    %c0_i32_1 = arith.constant 0 : i32
    return %c0_i32, %c0_i32_0 : i32, i32
  }
  func.func @transform_6(%arg0: i32) -> (i32, i32) {
    %c0_i32 = arith.constant 0 : i32
    %c0_i32_0 = arith.constant 0 : i32
    %c0_i32_1 = arith.constant 0 : i32
    return %c0_i32, %c0_i32_0 : i32, i32
  }
  func.func @transform_7(%arg0: i32) -> (i32, i32) {
    %c0_i32 = arith.constant 0 : i32
    %c0_i32_0 = arith.constant 0 : i32
    return %arg0, %c0_i32 : i32, i32
  }
}

</mosaic_0001>

<llo_original>
// kernel: forward.1
$region0: #{forward.1}
  #allocation0 [shape = 'u32[]', space=smem, size = 0x4, offset = 0x4, fixed_abs, tag = 'smem constant byte address 0x4 - core index']
  #allocation1 [shape = 'u32[144,128]{1,0:T(1,128)}', space=vmem, size = 0x12000, scoped, tag = 'internal scratch']
  %s0 = inlined_call_operand.vmem [shape: f32[32,64], index: 0, kind: input, shape index: {}]
  %s1 = inlined_call_operand.vmem [shape: bf16[192,128], index: 1, kind: input, shape index: {}]
  %s2 = inlined_call_operand.vmem [shape: f32[1,128], index: 2, kind: input, shape index: {}]
  %s3 = inlined_call_operand.vmem [shape: f32[1,128], index: 3, kind: input, shape index: {}]
  %s4 = inlined_call_operand.vmem [shape: bf16[384,256], index: 4, kind: input, shape index: {}]
  %s5 = inlined_call_operand.vmem [shape: f32[1,256], index: 5, kind: input, shape index: {}]
  %s6 = inlined_call_operand.vmem [shape: f32[1,256], index: 6, kind: input, shape index: {}]
  %s7 = inlined_call_operand.vmem [shape: f32[32,256], index: 7, kind: output, shape index: {}]
  %s8 = sld [smem:[#allocation0]]
  $region61: #{forward.1} parent=0
    _
  %s10 = ssub.s32 1, %s8
  %s11 = scalar_select 0, %s10, %s8
  loop: start=0, step=1, limit=4
  $region2: #{forward.1} parent=0 // loop_pre_header
    _
  $region3: #{forward.1} parent=0 // loop_header
    %s13 = sphi 0, %s17
    %p14 = scmp.ge.s32.totalorder %s13, 4
    %s23 = sphi 0, %s25
    %s26 = sphi 0, %s23
    %s27 = sphi 0, %s26
    %s43 = sphi 0, %s27
    %s47 = sphi 0, %s47
    %s49 = sphi 0, %s47
    %s50 = sphi 0, %s49
    %s64 = sphi 0, %s50
    %s68 = sphi 0, %s68
    %s70 = sphi 0, %s68
    %s71 = sphi 0, %s70
    %s85 = sphi 0, %s71
    %s89 = sphi 0, %s89
    %s91 = sphi 0, %s89
    %s92 = sphi 0, %s91
    %s106 = sphi 0, %s92
    %s110 = sphi 0, %s110
    %s112 = sphi 0, %s110
    %s113 = sphi 0, %s112
    %s127 = sphi 0, %s113
    %s131 = sphi 0, %s131
    %s133 = sphi 0, %s131
    %s134 = sphi 0, %s133
    %s148 = sphi 0, %s134
    %s152 = sphi 0, %s152
    %s154 = sphi 0, %s152
    %s155 = sphi 0, %s154
    %s169 = sphi 0, %s155
    %s175 = sphi 0, %s177
    %s178 = sphi 0, %s175
    %s179 = sphi 0, %s178
    %s195 = sphi 0, %s179
  $region4: #{forward.1} parent=0 // loop_header_branch
    %16 = sbr.rel (%p14) target = $region8
  $region5: #{forward.1} parent=0 // loop_body
    %s18 = ssub.s32 %s13, 1
    %s19 = ssub.s32 %s13, 2
    %s20 = sadd.s32 %s13, 1
    %s21 = ssub.s32 %s13, %s20
    %p22 = scmp.eq.s32.totalorder %s21, 0
    %s24 = sadd.s32 %s23, 1
    %s25 = scalar_select %p22, %s23, %s24
    %p28 = pneg %p22
    %p29 = scmp.eq.s32.totalorder %s13, 1
    %p30 = por %p28, %p29
    %p31 = scmp.ne.s32.totalorder %s23, %s26
    %p32 = scmp.eq.s32.totalorder %s13, 0
    %p33 = por %p31, %p32
    %p34 = scmp.ne.s32.totalorder %s23, %s26
    %p35 = scmp.eq.s32.totalorder %s18, 1
    %p36 = por %p34, %p35
    %p37 = scmp.ne.s32.totalorder %s26, %s27
    %p38 = scmp.eq.s32.totalorder %s18, 0
    %p39 = por %p37, %p38
    %p40 = scmp.ne.s32.totalorder %s26, %s27
    %p41 = scmp.eq.s32.totalorder %s19, 1
    %p42 = por %p40, %p41
    %p44 = scmp.ne.s32.totalorder %s27, %s43
    %p45 = scmp.eq.s32.totalorder %s19, 0
    %p46 = por %p44, %p45
    %s48 = sadd.s32 %s47, 1
    %p51 = scmp.eq.s32.totalorder %s13, 1
    %p52 = scmp.ne.s32.totalorder %s47, %s49
    %p53 = scmp.eq.s32.totalorder %s13, 0
    %p54 = por %p52, %p53
    %p55 = scmp.ne.s32.totalorder %s47, %s49
    %p56 = scmp.eq.s32.totalorder %s18, 1
    %p57 = por %p55, %p56
    %p58 = scmp.ne.s32.totalorder %s49, %s50
    %p59 = scmp.eq.s32.totalorder %s18, 0
    %p60 = por %p58, %p59
    %p61 = scmp.ne.s32.totalorder %s49, %s50
    %p62 = scmp.eq.s32.totalorder %s19, 1
    %p63 = por %p61, %p62
    %p65 = scmp.ne.s32.totalorder %s50, %s64
    %p66 = scmp.eq.s32.totalorder %s19, 0
    %p67 = por %p65, %p66
    %s69 = sadd.s32 %s68, 1
    %p72 = scmp.eq.s32.totalorder %s13, 1
    %p73 = scmp.ne.s32.totalorder %s68, %s70
    %p74 = scmp.eq.s32.totalorder %s13, 0
    %p75 = por %p73, %p74
    %p76 = scmp.ne.s32.totalorder %s68, %s70
    %p77 = scmp.eq.s32.totalorder %s18, 1
    %p78 = por %p76, %p77
    %p79 = scmp.ne.s32.totalorder %s70, %s71
    %p80 = scmp.eq.s32.totalorder %s18, 0
    %p81 = por %p79, %p80
    %p82 = scmp.ne.s32.totalorder %s70, %s71
    %p83 = scmp.eq.s32.totalorder %s19, 1
    %p84 = por %p82, %p83
    %p86 = scmp.ne.s32.totalorder %s71, %s85
    %p87 = scmp.eq.s32.totalorder %s19, 0
    %p88 = por %p86, %p87
    %s90 = sadd.s32 %s89, 1
    %p93 = scmp.eq.s32.totalorder %s13, 1
    %p94 = scmp.ne.s32.totalorder %s89, %s91
    %p95 = scmp.eq.s32.totalorder %s13, 0
    %p96 = por %p94, %p95
    %p97 = scmp.ne.s32.totalorder %s89, %s91
    %p98 = scmp.eq.s32.totalorder %s18, 1
    %p99 = por %p97, %p98
    %p100 = scmp.ne.s32.totalorder %s91, %s92
    %p101 = scmp.eq.s32.totalorder %s18, 0
    %p102 = por %p100, %p101
    %p103 = scmp.ne.s32.totalorder %s91, %s92
    %p104 = scmp.eq.s32.totalorder %s19, 1
    %p105 = por %p103, %p104
    %p107 = scmp.ne.s32.totalorder %s92, %s106
    %p108 = scmp.eq.s32.totalorder %s19, 0
    %p109 = por %p107, %p108
    %s111 = sadd.s32 %s110, 1
    %p114 = scmp.eq.s32.totalorder %s13, 1
    %p115 = scmp.ne.s32.totalorder %s110, %s112
    %p116 = scmp.eq.s32.totalorder %s13, 0
    %p117 = por %p115, %p116
    %p118 = scmp.ne.s32.totalorder %s110, %s112
    %p119 = scmp.eq.s32.totalorder %s18, 1
    %p120 = por %p118, %p119
    %p121 = scmp.ne.s32.totalorder %s112, %s113
    %p122 = scmp.eq.s32.totalorder %s18, 0
    %p123 = por %p121, %p122
    %p124 = scmp.ne.s32.totalorder %s112, %s113
    %p125 = scmp.eq.s32.totalorder %s19, 1
    %p126 = por %p124, %p125
    %p128 = scmp.ne.s32.totalorder %s113, %s127
    %p129 = scmp.eq.s32.totalorder %s19, 0
    %p130 = por %p128, %p129
    %s132 = sadd.s32 %s131, 1
    %p135 = scmp.eq.s32.totalorder %s13, 1
    %p136 = scmp.ne.s32.totalorder %s131, %s133
    %p137 = scmp.eq.s32.totalorder %s13, 0
    %p138 = por %p136, %p137
    %p139 = scmp.ne.s32.totalorder %s131, %s133
    %p140 = scmp.eq.s32.totalorder %s18, 1
    %p141 = por %p139, %p140
    %p142 = scmp.ne.s32.totalorder %s133, %s134
    %p143 = scmp.eq.s32.totalorder %s18, 0
    %p144 = por %p142, %p143
    %p145 = scmp.ne.s32.totalorder %s133, %s134
    %p146 = scmp.eq.s32.totalorder %s19, 1
    %p147 = por %p145, %p146
    %p149 = scmp.ne.s32.totalorder %s134, %s148
    %p150 = scmp.eq.s32.totalorder %s19, 0
    %p151 = por %p149, %p150
    %s153 = sadd.s32 %s152, 1
    %p156 = scmp.eq.s32.totalorder %s13, 1
    %p157 = scmp.ne.s32.totalorder %s152, %s154
    %p158 = scmp.eq.s32.totalorder %s13, 0
    %p159 = por %p157, %p158
    %p160 = scmp.ne.s32.totalorder %s152, %s154
    %p161 = scmp.eq.s32.totalorder %s18, 1
    %p162 = por %p160, %p161
    %p163 = scmp.ne.s32.totalorder %s154, %s155
    %p164 = scmp.eq.s32.totalorder %s18, 0
    %p165 = por %p163, %p164
    %p166 = scmp.ne.s32.totalorder %s154, %s155
    %p167 = scmp.eq.s32.totalorder %s19, 1
    %p168 = por %p166, %p167
    %p170 = scmp.ne.s32.totalorder %s155, %s169
    %p171 = scmp.eq.s32.totalorder %s19, 0
    %p172 = por %p170, %p171
    %s173 = ssub.s32 %s13, %s20
    %p174 = scmp.eq.s32.totalorder %s173, 0
    %s176 = sadd.s32 %s175, 1
    %s177 = scalar_select %p174, %s175, %s176
    %p180 = pneg %p174
    %p181 = scmp.eq.s32.totalorder %s13, 1
    %p182 = por %p180, %p181
    %p183 = scmp.ne.s32.totalorder %s175, %s178
    %p184 = scmp.eq.s32.totalorder %s13, 0
    %p185 = por %p183, %p184
    %p186 = scmp.ne.s32.totalorder %s175, %s178
    %p187 = scmp.eq.s32.totalorder %s18, 1
    %p188 = por %p186, %p187
    %p189 = scmp.ne.s32.totalorder %s178, %s179
    %p190 = scmp.eq.s32.totalorder %s18, 0
    %p191 = por %p189, %p190
    %p192 = scmp.ne.s32.totalorder %s178, %s179
    %p193 = scmp.eq.s32.totalorder %s19, 1
    %p194 = por %p192, %p193
    %p196 = scmp.ne.s32.totalorder %s179, %s195
    %p197 = scmp.eq.s32.totalorder %s19, 0
    %p198 = por %p196, %p197
    %p199 = scmp.le.s32.totalorder 1, %s13
    %p200 = scmp.lt.s32.totalorder %s13, 3
    %p201 = pnand %p199, %p200
    %p202 = pneg %p201
    // Predicated region
    $region9: #{forward.1} parent=5 // pred_check
      _
    $region10: #{forward.1} parent=5 // pred_check_branch
      %204 = sbr.rel (%p201) target = $region12
    $region11: #{forward.1} parent=5 // pred_region
      %s205 = ssub.s32 %s13, 1
      // Predicated region
      $region13: #{forward.1} parent=11 // pred_check
        %p206 = pneg %p60
      $region14: #{forward.1} parent=11 // pred_check_branch
        %208 = sbr.rel (%p206) target = $region16
      $region15: #{forward.1} parent=11 // pred_region
        _
      $region16: #{forward.1} parent=11 // pred_fallthru
        _
      // Predicated region
      $region17: #{forward.1} parent=11 // pred_check
        %p209 = pneg %p81
      $region18: #{forward.1} parent=11 // pred_check_branch
        %211 = sbr.rel (%p209) target = $region20
      $region19: #{forward.1} parent=11 // pred_region
        _
      $region20: #{forward.1} parent=11 // pred_fallthru
        _
      // Predicated region
      $region21: #{forward.1} parent=11 // pred_check
        %p212 = pneg %p102
      $region22: #{forward.1} parent=11 // pred_check_branch
        %214 = sbr.rel (%p212) target = $region24
      $region23: #{forward.1} parent=11 // pred_region
        _
      $region24: #{forward.1} parent=11 // pred_fallthru
        _
      // Predicated region
      $region25: #{forward.1} parent=11 // pred_check
        %p215 = pneg %p123
      $region26: #{forward.1} parent=11 // pred_check_branch
        %217 = sbr.rel (%p215) target = $region28
      $region27: #{forward.1} parent=11 // pred_region
        _
      $region28: #{forward.1} parent=11 // pred_fallthru
        _
      // Predicated region
      $region29: #{forward.1} parent=11 // pred_check
        %p218 = pneg %p144
      $region30: #{forward.1} parent=11 // pred_check_branch
        %220 = sbr.rel (%p218) target = $region32
      $region31: #{forward.1} parent=11 // pred_region
        _
      $region32: #{forward.1} parent=11 // pred_fallthru
        _
      // Predicated region
      $region33: #{forward.1} parent=11 // pred_check
        %p221 = pneg %p165
      $region34: #{forward.1} parent=11 // pred_check_branch
        %223 = sbr.rel (%p221) target = $region36
      $region35: #{forward.1} parent=11 // pred_region
        _
      $region36: #{forward.1} parent=11 // pred_fallthru
        _
    $region12: #{forward.1} parent=5 // pred_fallthru
      _
    %p224 = scmp.lt.s32.totalorder %s13, 2
    // Predicated region
    $region37: #{forward.1} parent=5 // pred_check
      %p225 = pneg %p224
    $region38: #{forward.1} parent=5 // pred_check_branch
      %227 = sbr.rel (%p225) target = $region40
    $region39: #{forward.1} parent=5 // pred_region
      // Predicated region
      $region41: #{forward.1} parent=39 // pred_check
        %p228 = pneg %p33
      $region42: #{forward.1} parent=39 // pred_check_branch
        %230 = sbr.rel (%p228) target = $region44
      $region43: #{forward.1} parent=39 // pred_region
        %s231 = smul.u32 2, %s13
        %p232 = scmp.lt.s32.totalorder %s231, 3
        %s233 = scalar_select %p232, %s231, 3
        %s234 = smul.addr %s233, 8
        %s235 = scalar_lea.vmem %s0, %s234
        %s236 = smul.u32 2, %s13
      $region44: #{forward.1} parent=39 // pred_fallthru
        _
    $region40: #{forward.1} parent=5 // pred_fallthru
      _
    %p237 = scmp.le.s32.totalorder 1, %s13
    %p238 = scmp.lt.s32.totalorder %s13, 3
    %p239 = pnand %p237, %p238
    %p240 = pneg %p239
    // Predicated region
    $region45: #{forward.1} parent=5 // pred_check
      _
    $region46: #{forward.1} parent=5 // pred_check_branch
      %242 = sbr.rel (%p239) target = $region48
    $region47: #{forward.1} parent=5 // pred_region
      %s243 = ssub.s32 %s13, 1
      %s244 = smul.u32 2, %s18
      %p245 = scmp.lt.s32.totalorder %s244, 3
      %s246 = scalar_select %p245, %s244, 3
      %s247 = smul.addr %s246, 8
      %s248 = scalar_lea.vmem %s0, %s247
      %p249 = pneg %p39
      %p250 = pneg %p36
      %p251 = pneg %p60
      %p252 = pneg %p57
      %p253 = pneg %p81
      %p254 = pneg %p78
      %p255 = pneg %p102
      %p256 = pneg %p99
      %p257 = pneg %p123
      %p258 = pneg %p120
      %p259 = pneg %p144
      %p260 = pneg %p141
      %p261 = pneg %p165
      %p262 = pneg %p162
      %p263 = pneg %p191
      %p264 = pneg %p188
      %s265 = smul.u32 2, %s18
      %p266 = scmp.lt.s32.totalorder %s265, 3
      %s267 = scalar_select %p266, %s265, 3
      %s268 = smul.addr %s267, 2
      %s269 = smul.addr %s268, 8
      %s270 = scalar_lea.vmem %s7, %s269
      %s271 = smul.u32 2, %s18
      %p272 = scmp.lt.s32.totalorder %s271, 3
      %s273 = scalar_select %p272, %s271, 3
      %s274 = smul.addr %s273, 8
      %s275 = scalar_lea.vmem %s0, %s274
      %s276 = smul.u32 2, %s18
      %s277 = smul.u32 2, %s18
      %p278 = scmp.lt.s32.totalorder %s277, 3
      %s279 = scalar_select %p278, %s277, 3
      %s280 = smul.addr %s279, 2
      %s281 = smul.addr %s280, 8
      %s282 = scalar_lea.vmem %s7, %s281
      %s283 = smul.u32 2, %s18
      %v285 = vlaneseq
      %v286 = vshrl.u32 %v285, 7
      %v287 = vadd.s32 %v286, 8
      %v288 = vld [vmem:[%s275] sm:$0xff]
      %v289 = vld [vmem:[%s275 + $0x8] sm:$0xff]
      %vm290 = vcmp.gt.s32.totalorder %v286, 0
      %vm291 = vcmp.gt.s32.totalorder %v287, 0
      %v292 = vrot.slane %v288, 7
      %v293 = vrot.slane %v289, 7
      %vm294 = vcmp.lt.s32.totalorder %v286, 1
      %v295 = vsel %vm294, %v292, %v293
      %v296 = vsel %vm294, %v293, %v292
      %v297 = vsel %vm290, 1, 0
      %v298 = vsel %vm291, 1, 0
      %vm299 = vcmp.eq.s32.totalorder %v297, 1
      %vm300 = vcmp.eq.s32.totalorder %v298, 1
      %v301 = vsel %vm299, %v296, 0.0
      %v302 = vsel %vm300, %v295, 0.0
      %vm303 = vcmp.lt.s32.totalorder %v286, 15
      %vm304 = vcmp.lt.s32.totalorder %v287, 15
      %v305 = vrot.slane %v288, 1
      %v306 = vrot.slane %v289, 1
      %vm307 = vcmp.lt.s32.totalorder %v286, 7
      %v308 = vsel %vm307, %v305, %v306
      %v309 = vsel %vm307, %v306, %v305
      %v310 = vsel %vm303, 1, 0
      %v311 = vsel %vm304, 1, 0
      %vm312 = vcmp.eq.s32.totalorder %v310, 1
      %vm313 = vcmp.eq.s32.totalorder %v311, 1
      %v314 = vsel %vm312, %v308, 0.0
      %v315 = vsel %vm313, %v309, 0.0
      %318 = vrot.lane.b32.xlu0 %v288, 64
      %v319 = vpop.permute.xlu0 %318
      %320 = vrot.lane.b32.xlu0 %v289, 64
      %v321 = vpop.permute.xlu0 %320
      %vm324 = vcmask 523264
      %v325 = vsel %vm324, %v301, %v319
      %v326 = vsel %vm324, %v302, %v321
      %v327 = vpack.c.bf16 %v326, %v325
      %v328 = vpack.c.bf16 %v315, %v314
      %v329 = vld [vmem:[%s1] sm:$0xf]
      %v330 = vld [vmem:[%s1 + $0x4] sm:$0xf]
      %v331 = vld [vmem:[%s1 + $0x8] sm:$0xf]
      %v332 = vld [vmem:[%s1 + $0xc] sm:$0xf]
      %v333 = vld [vmem:[%s1 + $0x10] sm:$0xf]
      %v334 = vld [vmem:[%s1 + $0x14] sm:$0xf]
      %v335 = vld [vmem:[%s1 + $0x18] sm:$0xf]
      %v336 = vld [vmem:[%s1 + $0x1c] sm:$0xf]
      %v337 = vld [vmem:[%s1 + $0x20] sm:$0xf]
      %v338 = vld [vmem:[%s1 + $0x24] sm:$0xf]
      %v339 = vld [vmem:[%s1 + $0x28] sm:$0xf]
      %v340 = vld [vmem:[%s1 + $0x2c] sm:$0xf]
      %v341 = vld [vmem:[%s1 + $0x30] sm:$0xf]
      %v342 = vld [vmem:[%s1 + $0x34] sm:$0xf]
      %v343 = vld [vmem:[%s1 + $0x38] sm:$0xf]
      %v344 = vld [vmem:[%s1 + $0x3c] sm:$0xf]
      %v345 = vld [vmem:[%s1 + $0x40] sm:$0xf]
      %v346 = vld [vmem:[%s1 + $0x44] sm:$0xf]
      %v347 = vld [vmem:[%s1 + $0x48] sm:$0xf]
      %v348 = vld [vmem:[%s1 + $0x4c] sm:$0xf]
      %v349 = vld [vmem:[%s1 + $0x50] sm:$0xf]
      %v350 = vld [vmem:[%s1 + $0x54] sm:$0xf]
      %v351 = vld [vmem:[%s1 + $0x58] sm:$0xf]
      %v352 = vld [vmem:[%s1 + $0x5c] sm:$0xf]
      %v377 = vunpack.c.l.b16 %v329
      %v378 = vunpack.c.l.b16 %v330
      %v379 = vunpack.c.l.b16 %v331
      %v380 = vunpack.c.l.b16 %v332
      %v381 = vunpack.c.l.b16 %v333
      %v382 = vunpack.c.l.b16 %v334
      %v383 = vunpack.c.l.b16 %v335
      %v384 = vunpack.c.l.b16 %v336
      %v385 = vunpack.c.l.b16 %v337
      %v386 = vunpack.c.l.b16 %v338
      %v387 = vunpack.c.l.b16 %v339
      %v388 = vunpack.c.l.b16 %v340
      %v389 = vunpack.c.l.b16 %v341
      %v390 = vunpack.c.l.b16 %v342
      %v391 = vunpack.c.l.b16 %v343
      %v392 = vunpack.c.l.b16 %v344
      %v393 = vunpack.c.l.b16 %v345
      %v394 = vunpack.c.l.b16 %v346
      %v395 = vunpack.c.l.b16 %v347
      %v396 = vunpack.c.l.b16 %v348
      %v397 = vunpack.c.l.b16 %v349
      %v398 = vunpack.c.l.b16 %v350
      %v399 = vunpack.c.l.b16 %v351
      %v400 = vunpack.c.l.b16 %v352
      %v401 = vpack.c.b16 %v378, %v377
      %v402 = vpack.c.b16 %v380, %v379
      %v403 = vpack.c.b16 %v382, %v381
      %v404 = vpack.c.b16 %v384, %v383
      %v405 = vpack.c.b16 %v386, %v385
      %v406 = vpack.c.b16 %v388, %v387
      %v407 = vpack.c.b16 %v390, %v389
      %v408 = vpack.c.b16 %v392, %v391
      %v409 = vpack.c.b16 %v394, %v393
      %v410 = vpack.c.b16 %v396, %v395
      %v411 = vpack.c.b16 %v398, %v397
      %v412 = vpack.c.b16 %v400, %v399
      %v426 = vsel %vm324, %v328, 0
      %428 = vmatprep.subr.bf16.mxu0 0
      %429 = vmatpush1.bf16.msra.mxu0 %v408
      %430 = vmatprep.subr.bf16.mxu0 0
      %431 = vmatpush1.bf16.msra.mxu0 %v407
      %432 = vmatprep.subr.bf16.mxu0 0
      %433 = vmatpush1.bf16.msra.mxu0 %v406
      %434 = vmatprep.subr.bf16.mxu0 0
      %435 = vmatpush1.bf16.msra.mxu0 %v405
      %436 = vmatprep.subr.bf16.mxu0 0
      %437 = vmatpush1.bf16.msra.mxu0 %v404
      %438 = vmatprep.subr.bf16.mxu0 0
      %439 = vmatpush1.bf16.msra.mxu0 %v403
      %440 = vmatprep.subr.bf16.mxu0 0
      %441 = vmatpush1.bf16.msra.mxu0 %v402
      %442 = vmatprep.subr.bf16.mxu0 0
      %443 = vmatpush1.bf16.msra.mxu0 %v401
      %444 = vmatprep.subr.bf16.mxu0 0
      %445 = vmatpush2.bf16.msra.mxu0 0
      %446 = vmatprep.subr.bf16.mxu0 0
      %447 = vmatpush2.bf16.msra.mxu0 0
      %448 = vmatprep.subr.bf16.mxu0 0
      %449 = vmatpush2.bf16.msra.mxu0 0
      %450 = vmatprep.subr.bf16.mxu0 0
      %451 = vmatpush2.bf16.msra.mxu0 0
      %452 = vmatprep.subr.bf16.mxu0 0
      %453 = vmatpush2.bf16.msra.mxu0 %v412
      %454 = vmatprep.subr.bf16.mxu0 0
      %455 = vmatpush2.bf16.msra.mxu0 %v411
      %456 = vmatprep.subr.bf16.mxu0 0
      %457 = vmatpush2.bf16.msra.mxu0 %v410
      %458 = vmatprep.subr.bf16.mxu0 0
      %459 = vmatpush2.bf16.msra.mxu0 %v409
      %460 = vmatprep.mubr.bf16.mxu0 %v426
      %461 = vmatmul.mubr.bf16.gmra.mxu0 %v327
      %v462 = vpop.f32.mrf.mxu0
      %v463 = vadd.f32 0.0, %v462
      %v464 = vpop.f32.mrf.mxu0
      %v465 = vpop.f32.mrf.mxu0
      %v466 = vadd.f32 0.0, %v465
      %v467 = vpop.f32.mrf.mxu0
      %468 = vdwg.mxu0
      %v469 = vld [vmem:[%s2] sm:$0x1]
      %v471 = vlaneseq
      %v472 = vshrl.u32 %v471, 7
      %v473 = vsub.s32 0, %v472
      %v474 = vrot.slane %v469, %v473
      %v476 = vmul.f32 %v463, %v474
      %v477 = vmul.f32 %v466, %v474
      %v478 = vld [vmem:[%s3] sm:$0x1]
      %v480 = vlaneseq
      %v481 = vshrl.u32 %v480, 7
      %v482 = vsub.s32 0, %v481
      %v483 = vrot.slane %v478, %v482
      %v485 = vadd.f32 %v476, %v483
      %v486 = vadd.f32 %v477, %v483
      %v487 = vmax.f32 %v485, 0.0
      %v488 = vmax.f32 %v486, 0.0
      %v489 = vrot.slane %v487, 7
      %v490 = vrot.slane %v488, 7
      %v491 = vsel %vm294, %v489, %v490
      %v492 = vsel %vm294, %v490, %v489
      %v493 = vsel %vm299, %v492, 0.0
      %v494 = vsel %vm300, %v491, 0.0
      %v495 = vrot.slane %v487, 1
      %v496 = vrot.slane %v488, 1
      %v497 = vsel %vm307, %v495, %v496
      %v498 = vsel %vm307, %v496, %v495
      %v499 = vsel %vm312, %v497, 0.0
      %v500 = vsel %vm313, %v498, 0.0
      %v501 = vpack.c.bf16 %v494, %v493
      %v502 = vpack.c.bf16 %v488, %v487
      %v503 = vpack.c.bf16 %v500, %v499
      %v504 = vld [vmem:[%s4] sm:$0xff]
      %v505 = vld [vmem:[%s4 + $0x8] sm:$0xff]
      %v506 = vld [vmem:[%s4 + $0x10] sm:$0xff]
      %v507 = vld [vmem:[%s4 + $0x18] sm:$0xff]
      %v508 = vld [vmem:[%s4 + $0x20] sm:$0xff]
      %v509 = vld [vmem:[%s4 + $0x28] sm:$0xff]
      %v510 = vld [vmem:[%s4 + $0x30] sm:$0xff]
      %v511 = vld [vmem:[%s4 + $0x38] sm:$0xff]
      %v512 = vld [vmem:[%s4 + $0x40] sm:$0xff]
      %v513 = vld [vmem:[%s4 + $0x48] sm:$0xff]
      %v514 = vld [vmem:[%s4 + $0x50] sm:$0xff]
      %v515 = vld [vmem:[%s4 + $0x58] sm:$0xff]
      %v516 = vld [vmem:[%s4 + $0x60] sm:$0xff]
      %v517 = vld [vmem:[%s4 + $0x68] sm:$0xff]
      %v518 = vld [vmem:[%s4 + $0x70] sm:$0xff]
      %v519 = vld [vmem:[%s4 + $0x78] sm:$0xff]
      %v520 = vld [vmem:[%s4 + $0x80] sm:$0xff]
      %v521 = vld [vmem:[%s4 + $0x88] sm:$0xff]
      %v522 = vld [vmem:[%s4 + $0x90] sm:$0xff]
      %v523 = vld [vmem:[%s4 + $0x98] sm:$0xff]
      %v524 = vld [vmem:[%s4 + $0xa0] sm:$0xff]
      %v525 = vld [vmem:[%s4 + $0xa8] sm:$0xff]
      %v526 = vld [vmem:[%s4 + $0xb0] sm:$0xff]
      %v527 = vld [vmem:[%s4 + $0xb8] sm:$0xff]
      %v528 = vld [vmem:[%s4 + $0xc0] sm:$0xff]
      %v529 = vld [vmem:[%s4 + $0xc8] sm:$0xff]
      %v530 = vld [vmem:[%s4 + $0xd0] sm:$0xff]
      %v531 = vld [vmem:[%s4 + $0xd8] sm:$0xff]
      %v532 = vld [vmem:[%s4 + $0xe0] sm:$0xff]
      %v533 = vld [vmem:[%s4 + $0xe8] sm:$0xff]
      %v534 = vld [vmem:[%s4 + $0xf0] sm:$0xff]
      %v535 = vld [vmem:[%s4 + $0xf8] sm:$0xff]
      %v536 = vld [vmem:[%s4 + $0x100] sm:$0xff]
      %v537 = vld [vmem:[%s4 + $0x108] sm:$0xff]
      %v538 = vld [vmem:[%s4 + $0x110] sm:$0xff]
      %v539 = vld [vmem:[%s4 + $0x118] sm:$0xff]
      %v540 = vld [vmem:[%s4 + $0x120] sm:$0xff]
      %v541 = vld [vmem:[%s4 + $0x128] sm:$0xff]
      %v542 = vld [vmem:[%s4 + $0x130] sm:$0xff]
      %v543 = vld [vmem:[%s4 + $0x138] sm:$0xff]
      %v544 = vld [vmem:[%s4 + $0x140] sm:$0xff]
      %v545 = vld [vmem:[%s4 + $0x148] sm:$0xff]
      %v546 = vld [vmem:[%s4 + $0x150] sm:$0xff]
      %v547 = vld [vmem:[%s4 + $0x158] sm:$0xff]
      %v548 = vld [vmem:[%s4 + $0x160] sm:$0xff]
      %v549 = vld [vmem:[%s4 + $0x168] sm:$0xff]
      %v550 = vld [vmem:[%s4 + $0x170] sm:$0xff]
      %v551 = vld [vmem:[%s4 + $0x178] sm:$0xff]
      %v600 = vunpack.c.l.b16 %v504
      %v601 = vunpack.c.h.b16 %v504
      %v602 = vunpack.c.l.b16 %v505
      %v603 = vunpack.c.h.b16 %v505
      %v604 = vunpack.c.l.b16 %v506
      %v605 = vunpack.c.h.b16 %v506
      %v606 = vunpack.c.l.b16 %v507
      %v607 = vunpack.c.h.b16 %v507
      %v608 = vunpack.c.l.b16 %v508
      %v609 = vunpack.c.h.b16 %v508
      %v610 = vunpack.c.l.b16 %v509
      %v611 = vunpack.c.h.b16 %v509
      %v612 = vunpack.c.l.b16 %v510
      %v613 = vunpack.c.h.b16 %v510
      %v614 = vunpack.c.l.b16 %v511
      %v615 = vunpack.c.h.b16 %v511
      %v616 = vunpack.c.l.b16 %v512
      %v617 = vunpack.c.h.b16 %v512
      %v618 = vunpack.c.l.b16 %v513
      %v619 = vunpack.c.h.b16 %v513
      %v620 = vunpack.c.l.b16 %v514
      %v621 = vunpack.c.h.b16 %v514
      %v622 = vunpack.c.l.b16 %v515
      %v623 = vunpack.c.h.b16 %v515
      %v624 = vunpack.c.l.b16 %v516
      %v625 = vunpack.c.h.b16 %v516
      %v626 = vunpack.c.l.b16 %v517
      %v627 = vunpack.c.h.b16 %v517
      %v628 = vunpack.c.l.b16 %v518
      %v629 = vunpack.c.h.b16 %v518
      %v630 = vunpack.c.l.b16 %v519
      %v631 = vunpack.c.h.b16 %v519
      %v632 = vunpack.c.l.b16 %v520
      %v633 = vunpack.c.h.b16 %v520
      %v634 = vunpack.c.l.b16 %v521
      %v635 = vunpack.c.h.b16 %v521
      %v636 = vunpack.c.l.b16 %v522
      %v637 = vunpack.c.h.b16 %v522
      %v638 = vunpack.c.l.b16 %v523
      %v639 = vunpack.c.h.b16 %v523
      %v640 = vunpack.c.l.b16 %v524
      %v641 = vunpack.c.h.b16 %v524
      %v642 = vunpack.c.l.b16 %v525
      %v643 = vunpack.c.h.b16 %v525
      %v644 = vunpack.c.l.b16 %v526
      %v645 = vunpack.c.h.b16 %v526
      %v646 = vunpack.c.l.b16 %v527
      %v647 = vunpack.c.h.b16 %v527
      %v648 = vunpack.c.l.b16 %v528
      %v649 = vunpack.c.h.b16 %v528
      %v650 = vunpack.c.l.b16 %v529
      %v651 = vunpack.c.h.b16 %v529
      %v652 = vunpack.c.l.b16 %v530
      %v653 = vunpack.c.h.b16 %v530
      %v654 = vunpack.c.l.b16 %v531
      %v655 = vunpack.c.h.b16 %v531
      %v656 = vunpack.c.l.b16 %v532
      %v657 = vunpack.c.h.b16 %v532
      %v658 = vunpack.c.l.b16 %v533
      %v659 = vunpack.c.h.b16 %v533
      %v660 = vunpack.c.l.b16 %v534
      %v661 = vunpack.c.h.b16 %v534
      %v662 = vunpack.c.l.b16 %v535
      %v663 = vunpack.c.h.b16 %v535
      %v664 = vunpack.c.l.b16 %v536
      %v665 = vunpack.c.h.b16 %v536
      %v666 = vunpack.c.l.b16 %v537
      %v667 = vunpack.c.h.b16 %v537
      %v668 = vunpack.c.l.b16 %v538
      %v669 = vunpack.c.h.b16 %v538
      %v670 = vunpack.c.l.b16 %v539
      %v671 = vunpack.c.h.b16 %v539
      %v672 = vunpack.c.l.b16 %v540
      %v673 = vunpack.c.h.b16 %v540
      %v674 = vunpack.c.l.b16 %v541
      %v675 = vunpack.c.h.b16 %v541
      %v676 = vunpack.c.l.b16 %v542
      %v677 = vunpack.c.h.b16 %v542
      %v678 = vunpack.c.l.b16 %v543
      %v679 = vunpack.c.h.b16 %v543
      %v680 = vunpack.c.l.b16 %v544
      %v681 = vunpack.c.h.b16 %v544
      %v682 = vunpack.c.l.b16 %v545
      %v683 = vunpack.c.h.b16 %v545
      %v684 = vunpack.c.l.b16 %v546
      %v685 = vunpack.c.h.b16 %v546
      %v686 = vunpack.c.l.b16 %v547
      %v687 = vunpack.c.h.b16 %v547
      %v688 = vunpack.c.l.b16 %v548
      %v689 = vunpack.c.h.b16 %v548
      %v690 = vunpack.c.l.b16 %v549
      %v691 = vunpack.c.h.b16 %v549
      %v692 = vunpack.c.l.b16 %v550
      %v693 = vunpack.c.h.b16 %v550
      %v694 = vunpack.c.l.b16 %v551
      %v695 = vunpack.c.h.b16 %v551
      %v696 = vpack.c.b16 %v602, %v600
      %v697 = vpack.c.b16 %v603, %v601
      %v698 = vpack.c.b16 %v606, %v604
      %v699 = vpack.c.b16 %v607, %v605
      %v700 = vpack.c.b16 %v610, %v608
      %v701 = vpack.c.b16 %v611, %v609
      %v702 = vpack.c.b16 %v614, %v612
      %v703 = vpack.c.b16 %v615, %v613
      %v704 = vpack.c.b16 %v618, %v616
      %v705 = vpack.c.b16 %v619, %v617
      %v706 = vpack.c.b16 %v622, %v620
      %v707 = vpack.c.b16 %v623, %v621
      %v708 = vpack.c.b16 %v626, %v624
      %v709 = vpack.c.b16 %v627, %v625
      %v710 = vpack.c.b16 %v630, %v628
      %v711 = vpack.c.b16 %v631, %v629
      %v712 = vpack.c.b16 %v634, %v632
      %v713 = vpack.c.b16 %v635, %v633
      %v714 = vpack.c.b16 %v638, %v636
      %v715 = vpack.c.b16 %v639, %v637
      %v716 = vpack.c.b16 %v642, %v640
      %v717 = vpack.c.b16 %v643, %v641
      %v718 = vpack.c.b16 %v646, %v644
      %v719 = vpack.c.b16 %v647, %v645
      %v720 = vpack.c.b16 %v650, %v648
      %v721 = vpack.c.b16 %v651, %v649
      %v722 = vpack.c.b16 %v654, %v652
      %v723 = vpack.c.b16 %v655, %v653
      %v724 = vpack.c.b16 %v658, %v656
      %v725 = vpack.c.b16 %v659, %v657
      %v726 = vpack.c.b16 %v662, %v660
      %v727 = vpack.c.b16 %v663, %v661
      %v728 = vpack.c.b16 %v666, %v664
      %v729 = vpack.c.b16 %v667, %v665
      %v730 = vpack.c.b16 %v670, %v668
      %v731 = vpack.c.b16 %v671, %v669
      %v732 = vpack.c.b16 %v674, %v672
      %v733 = vpack.c.b16 %v675, %v673
      %v734 = vpack.c.b16 %v678, %v676
      %v735 = vpack.c.b16 %v679, %v677
      %v736 = vpack.c.b16 %v682, %v680
      %v737 = vpack.c.b16 %v683, %v681
      %v738 = vpack.c.b16 %v686, %v684
      %v739 = vpack.c.b16 %v687, %v685
      %v740 = vpack.c.b16 %v690, %v688
      %v741 = vpack.c.b16 %v691, %v689
      %v742 = vpack.c.b16 %v694, %v692
      %v743 = vpack.c.b16 %v695, %v693
      %792 = vmatprep.subr.bf16.mxu0 %v711
      %793 = vmatpush1.bf16.msra.mxu0 %v710
      %794 = vmatprep.subr.bf16.mxu0 %v709
      %795 = vmatpush1.bf16.msra.mxu0 %v708
      %796 = vmatprep.subr.bf16.mxu0 %v707
      %797 = vmatpush1.bf16.msra.mxu0 %v706
      %798 = vmatprep.subr.bf16.mxu0 %v705
      %799 = vmatpush1.bf16.msra.mxu0 %v704
      %800 = vmatprep.subr.bf16.mxu0 %v703
      %801 = vmatpush1.bf16.msra.mxu0 %v702
      %802 = vmatprep.subr.bf16.mxu0 %v701
      %803 = vmatpush1.bf16.msra.mxu0 %v700
      %804 = vmatprep.subr.bf16.mxu0 %v699
      %805 = vmatpush1.bf16.msra.mxu0 %v698
      %806 = vmatprep.subr.bf16.mxu0 %v697
      %807 = vmatpush1.bf16.msra.mxu0 %v696
      %808 = vmatprep.subr.bf16.mxu0 %v727
      %809 = vmatpush2.bf16.msra.mxu0 %v726
      %810 = vmatprep.subr.bf16.mxu0 %v725
      %811 = vmatpush2.bf16.msra.mxu0 %v724
      %812 = vmatprep.subr.bf16.mxu0 %v723
      %813 = vmatpush2.bf16.msra.mxu0 %v722
      %814 = vmatprep.subr.bf16.mxu0 %v721
      %815 = vmatpush2.bf16.msra.mxu0 %v720
      %816 = vmatprep.subr.bf16.mxu0 %v719
      %817 = vmatpush2.bf16.msra.mxu0 %v718
      %818 = vmatprep.subr.bf16.mxu0 %v717
      %819 = vmatpush2.bf16.msra.mxu0 %v716
      %820 = vmatprep.subr.bf16.mxu0 %v715
      %821 = vmatpush2.bf16.msra.mxu0 %v714
      %822 = vmatprep.subr.bf16.mxu0 %v713
      %823 = vmatpush2.bf16.msra.mxu0 %v712
      %824 = vmatprep.mubr.bf16.mxu0 %v502
      %825 = vmatmul.mubr.bf16.gmra.mxu0 %v501
      %v826 = vpop.f32.mrf.mxu0
      %v827 = vadd.f32 0.0, %v826
      %v828 = vpop.f32.mrf.mxu0
      %v829 = vadd.f32 0.0, %v828
      %v830 = vpop.f32.mrf.mxu0
      %v831 = vadd.f32 0.0, %v830
      %v832 = vpop.f32.mrf.mxu0
      %v833 = vadd.f32 0.0, %v832
      %834 = vdwg.mxu0
      %835 = vmatprep.subr.bf16.mxu0 %v743
      %836 = vmatpush1.bf16.msra.mxu0 %v742
      %837 = vmatprep.subr.bf16.mxu0 %v741
      %838 = vmatpush1.bf16.msra.mxu0 %v740
      %839 = vmatprep.subr.bf16.mxu0 %v739
      %840 = vmatpush1.bf16.msra.mxu0 %v738
      %841 = vmatprep.subr.bf16.mxu0 %v737
      %842 = vmatpush1.bf16.msra.mxu0 %v736
      %843 = vmatprep.subr.bf16.mxu0 %v735
      %844 = vmatpush1.bf16.msra.mxu0 %v734
      %845 = vmatprep.subr.bf16.mxu0 %v733
      %846 = vmatpush1.bf16.msra.mxu0 %v732
      %847 = vmatprep.subr.bf16.mxu0 %v731
      %848 = vmatpush1.bf16.msra.mxu0 %v730
      %849 = vmatprep.subr.bf16.mxu0 %v729
      %850 = vmatpush1.bf16.msra.mxu0 %v728
      %851 = vmatprep.subr.bf16.mxu0 0
      %852 = vmatpush2.bf16.msra.mxu0 0
      %853 = vmatprep.subr.bf16.mxu0 0
      %854 = vmatpush2.bf16.msra.mxu0 0
      %855 = vmatprep.subr.bf16.mxu0 0
      %856 = vmatpush2.bf16.msra.mxu0 0
      %857 = vmatprep.subr.bf16.mxu0 0
      %858 = vmatpush2.bf16.msra.mxu0 0
      %859 = vmatprep.subr.bf16.mxu0 0
      %860 = vmatpush2.bf16.msra.mxu0 0
      %861 = vmatprep.subr.bf16.mxu0 0
      %862 = vmatpush2.bf16.msra.mxu0 0
      %863 = vmatprep.subr.bf16.mxu0 0
      %864 = vmatpush2.bf16.msra.mxu0 0
      %865 = vmatprep.subr.bf16.mxu0 0
      %866 = vmatpush2.bf16.msra.mxu0 0
      %867 = vmatprep.mubr.bf16.mxu0 0
      %868 = vmatmul.mubr.bf16.gmra.mxu0 %v503
      %v869 = vpop.f32.mrf.mxu0
      %v870 = vadd.f32 %v827, %v869
      %v871 = vpop.f32.mrf.mxu0
      %v872 = vadd.f32 %v829, %v871
      %v873 = vpop.f32.mrf.mxu0
      %v874 = vadd.f32 %v831, %v873
      %v875 = vpop.f32.mrf.mxu0
      %v876 = vadd.f32 %v833, %v875
      %877 = vdwg.mxu0
      %v878 = vld [vmem:[%s5] sm:$0x3]
      %v880 = vlaneseq
      %v881 = vshrl.u32 %v880, 7
      %v882 = vsub.s32 0, %v881
      %v883 = vrot.slane %v878, %v882
      %v884 = vlaneseq
      %v885 = vshrl.u32 %v884, 7
      %v886 = vsub.s32 1, %v885
      %v887 = vrot.slane %v878, %v886
      %v890 = vmul.f32 %v870, %v883
      %v891 = vmul.f32 %v872, %v887
      %v892 = vmul.f32 %v874, %v883
      %v893 = vmul.f32 %v876, %v887
      %v894 = vld [vmem:[%s6] sm:$0x3]
      %v896 = vlaneseq
      %v897 = vshrl.u32 %v896, 7
      %v898 = vsub.s32 0, %v897
      %v899 = vrot.slane %v894, %v898
      %v900 = vlaneseq
      %v901 = vshrl.u32 %v900, 7
      %v902 = vsub.s32 1, %v901
      %v903 = vrot.slane %v894, %v902
      %v906 = vadd.f32 %v890, %v899
      %v907 = vadd.f32 %v891, %v903
      %v908 = vadd.f32 %v892, %v899
      %v909 = vadd.f32 %v893, %v903
      %v910 = vmax.f32 %v906, 0.0
      %v911 = vmax.f32 %v907, 0.0
      %v912 = vmax.f32 %v908, 0.0
      %v913 = vmax.f32 %v909, 0.0
      %914 = vst [vmem:[%s282] sm:$0xff] %v910
      %915 = vst [vmem:[%s282 + $0x8] sm:$0xff] %v911
      %916 = vst [vmem:[%s282 + $0x10] sm:$0xff] %v912
      %917 = vst [vmem:[%s282 + $0x18] sm:$0xff] %v913
      %s918 = smul.u32 2, %s18
      %p919 = scmp.lt.s32.totalorder %s918, 3
      %s920 = scalar_select %p919, %s918, 3
      %s921 = smul.addr %s920, 2
      %s922 = smul.addr %s921, 8
      %s923 = scalar_lea.vmem %s7, %s922
      // Predicated region
      $region49: #{forward.1} parent=47 // pred_check
        %p924 = pneg %p188
      $region50: #{forward.1} parent=47 // pred_check_branch
        %926 = sbr.rel (%p924) target = $region52
      $region51: #{forward.1} parent=47 // pred_region
        %s927 = smul.u32 2, %s18
      $region52: #{forward.1} parent=47 // pred_fallthru
        _
    $region48: #{forward.1} parent=5 // pred_fallthru
      _
    %p928 = scmp.le.s32.totalorder 2, %s13
    // Predicated region
    $region53: #{forward.1} parent=5 // pred_check
      %p929 = pneg %p928
    $region54: #{forward.1} parent=5 // pred_check_branch
      %931 = sbr.rel (%p929) target = $region56
    $region55: #{forward.1} parent=5 // pred_region
      %s932 = ssub.s32 %s13, 2
      // Predicated region
      $region57: #{forward.1} parent=55 // pred_check
        %p933 = pneg %p194
      $region58: #{forward.1} parent=55 // pred_check_branch
        %935 = sbr.rel (%p933) target = $region60
      $region59: #{forward.1} parent=55 // pred_region
        %s936 = smul.u32 2, %s19
        %p937 = scmp.lt.s32.totalorder %s936, 3
        %s938 = scalar_select %p937, %s936, 3
        %s939 = smul.addr %s938, 2
        %s940 = smul.addr %s939, 8
        %s941 = scalar_lea.vmem %s7, %s940
      $region60: #{forward.1} parent=55 // pred_fallthru
        _
    $region56: #{forward.1} parent=5 // pred_fallthru
      _
  $region6: #{forward.1} parent=0 // loop_footer
    %s17 = sadd.s32 1, %s13
  $region7: #{forward.1} parent=0 // loop_footer_branch
    %12 = sbr.rel target = $region3
  $region8: #{forward.1} parent=0 // loop_exit
    _

</llo_original>
